<compile_context>
chip_gen: v7x
topology: tpu7x:2x2x1
jax: 0.10.0
libtpu: 0.0.40
codegen_flags: <defaults>
</compile_context>

<pallas_src>
import functools
import math

import jax
import jax.numpy as jnp
from jax.experimental import pallas as pl
from jax.experimental.pallas import tpu as pltpu

_SUBLANES = 8
_LANES = 128
# Per-block byte budget (one input OR output block).  The pipeline
# double-buffers both input and output blocks, so pipelined footprint is
# ~4x this value -- kept well under v5e's 16 MiB scoped-VMEM default.
_VMEM_BLOCK_BUDGET = 2 * 1024 * 1024
# Cap on how many (H, W*C) slabs are fused into one leading block dimension
# (bounds the static unroll of the XLU-roll loop; 128 slabs is already far
# past the per-step-overhead amortization point).
_MAX_LEAD = 128


def _largest_divisor(n, fits):
    best = 1
    for t in range(1, n + 1):
        if n % t == 0 and fits(t):
            best = t
    return best


def _shift_kernel(x_ref, o_ref, *, sh, sl, hw_row, hw_lane):
    """out[..., i, j] = x[..., (i - sh) % H, (j - sl) % L] on the block."""
    shape = x_ref.shape
    rank = len(shape)
    H, L = shape[-2], shape[-1]

    if sh == 0 and sl == 0:
        # Shift fully handled by the index_map: straight copy.
        o_ref[...] = x_ref[...]
        return

    if (sh == 0 or hw_row) and (sl == 0 or hw_lane):
        # XLU rotate path: runs in its own VLIW slot, hidden under the block
        # DMAs.  Operate on 2-D (sublane, lane) tiles; for rank-3 blocks walk
        # the (static, small) leading dimension.
        leads = [None] if rank == 2 else list(range(shape[0]))
        for b in leads:
            x = x_ref[...] if b is None else x_ref[b]
            if sh:
                x = pltpu.roll(x, sh, axis=0)
            if sl:
                x = pltpu.roll(x, sl, axis=1)
            if b is None:
                o_ref[...] = x
            else:
                o_ref[b] = x
        return

    # Segmented-store path: up to four direct rectangular ref->ref copies.
    # No rolled intermediate (concat temporary) is materialized; each element
    # is loaded and stored exactly once.
    lead = (slice(None),) * (rank - 2)
    if sh:
        row_segs = [(slice(sh, H), slice(0, H - sh)),
                    (slice(0, sh), slice(H - sh, H))]
    else:
        row_segs = [(slice(0, H), slice(0, H))]
    if sl:
        lane_segs = [(slice(sl, L), slice(0, L - sl)),
                     (slice(0, sl), slice(L - sl, L))]
    else:
        lane_segs = [(slice(0, L), slice(0, L))]
    for o_r, i_r in row_segs:
        for o_l, i_l in lane_segs:
            o_ref[lead + (o_r, o_l)] = x_ref[lead + (i_r, i_l)]


def cyclic_shift_3d(x, displacement):
    """Equivalent of torch.roll(x, shifts=displacement, dims=(1, 2, 3))."""
    B, D, H, W, C = x.shape
    sd = int(displacement[0]) % D
    sh = int(displacement[1]) % H
    sw = int(displacement[2]) % W
    if sd == 0 and sh == 0 and sw == 0:
        # No-op shift: skip the 2x-bytes HBM round trip entirely.
        return x

    itemsize = jnp.dtype(x.dtype).itemsize
    packing = max(1, 4 // itemsize)          # rows packed per 32-bit sublane
    WC = W * C
    sl = (sw * C) % WC                       # fused-W roll == lane roll

    # XLU-rotate legality per axis.  Lane rolls only need a lane-aligned
    # width (any dtype); row (sublane) rolls need a native sublane-tile row
    # count and, for packed dtypes, a shift on packed-row boundaries.
    hw_lane = (WC % _LANES == 0)
    hw_row = (H % (_SUBLANES * packing) == 0) and (sh % packing == 0)

    cost = pl.CostEstimate(flops=0, transcendentals=0,
                           bytes_accessed=2 * x.size * itemsize)
    slab_bytes = H * WC * itemsize
    fits = lambda t: (t * slab_bytes <= _VMEM_BLOCK_BUDGET) and (t <= _MAX_LEAD)

    if slab_bytes <= _VMEM_BLOCK_BUDGET:
        kernel = functools.partial(_shift_kernel, sh=sh, sl=sl,
                                   hw_row=hw_row, hw_lane=hw_lane)
        if sd == 0:
            # No D roll: fuse B*D into one leading axis and block it so each
            # grid step moves a ~budget-sized slab (amortizes the ~0.35 us
            # per-step pipeline overhead on tiny (H, W*C) slabs).
            N = B * D
            xf = x.reshape(N, H, WC)
            TN = _largest_divisor(N, fits)
            spec = pl.BlockSpec((TN, H, WC), lambda i: (i, 0, 0))
            out = pl.pallas_call(
                kernel,
                out_shape=jax.ShapeDtypeStruct((N, H, WC), x.dtype),
                grid=(N // TN,),
                in_specs=[spec],
                out_specs=spec,
                compiler_params=pltpu.CompilerParams(
                    dimension_semantics=("parallel",)),
                cost_estimate=cost,
            )(xf)
            return out.reshape(B, D, H, W, C)

        # D roll handled for free in the index_map (D blocked at size 1);
        # block across B to amortize per-step overhead.
        xf = x.reshape(B, D, H, WC)
        TB = _largest_divisor(B, fits)
        block = (TB, None, H, WC)
        out = pl.pallas_call(
            kernel,
            out_shape=jax.ShapeDtypeStruct((B, D, H, WC), x.dtype),
            grid=(B // TB, D),
            in_specs=[pl.BlockSpec(block,
                                   lambda b, d: (b, (d - sd + D) % D, 0, 0))],
            out_specs=pl.BlockSpec(block, lambda b, d: (b, d, 0, 0)),
            compiler_params=pltpu.CompilerParams(
                dimension_semantics=("parallel", "parallel")),
            cost_estimate=cost,
        )(xf)
        return out.reshape(B, D, H, W, C)

    # ---- Oversized (H, W*C) slab: tile H on the grid with TH-row blocks. ----
    # TH must (a) fit the budget, (b) divide H, (c) divide sh so the H roll
    # can live in the index_map without wrapping inside a block, and (d) be a
    # native sublane-tile multiple so the block layout is legal.
    row_tile = _SUBLANES * packing
    base = H if sh == 0 else math.gcd(H, sh)
    TH = 0
    for t in range(1, base + 1):
        if (base % t == 0 and t % row_tile == 0
                and t * WC * itemsize <= _VMEM_BLOCK_BUDGET):
            TH = t
    if TH == 0:
        # TODO(synk): split the wrapped H roll into two rectangular output
        # segments (two pallas_calls) instead of falling back to XLA for
        # these rare, awkwardly-shifted oversized shapes.
        return jnp.roll(x, shift=(sd, sh, sw), axis=(1, 2, 3))

    HB, SHB = H // TH, sh // TH
    kernel = functools.partial(_shift_kernel, sh=0, sl=sl,
                               hw_row=False, hw_lane=hw_lane)
    xf = x.reshape(B, D, H, WC)
    block = (None, None, TH, WC)
    out = pl.pallas_call(
        kernel,
        out_shape=jax.ShapeDtypeStruct((B, D, H, WC), x.dtype),
        grid=(B, D, HB),
        in_specs=[pl.BlockSpec(
            block,
            lambda b, d, h: (b, (d - sd + D) % D, (h - SHB + HB) % HB, 0))],
        out_specs=pl.BlockSpec(block, lambda b, d, h: (b, d, h, 0)),
        compiler_params=pltpu.CompilerParams(
            dimension_semantics=("parallel", "parallel", "parallel")),
        cost_estimate=cost,
    )(xf)
    return out.reshape(B, D, H, W, C)


if __name__ == "__main__":
    key = jax.random.PRNGKey(0)
    k1, k2, k3, k4 = jax.random.split(key, 4)

    def check(x, disp, tag):
        out = jax.block_until_ready(cyclic_shift_3d(x, disp))
        ref = jnp.roll(x, shift=disp, axis=(1, 2, 3))
        assert out.shape == x.shape and out.dtype == x.dtype, tag
        assert jnp.array_equal(out, ref), "mismatch: " + tag

    # 1) Aligned f32 (H % 8 == 0, W*C == 128): XLU-roll path, D via index_map.
    x1 = jax.random.normal(k1, (2, 4, 8, 8, 16), dtype=jnp.float32)
    check(x1, (2, -3, 1), "aligned / hw-roll path")

    # 2) Unaligned H (= 6): segmented-store (quadrant copy) path.
    x2 = jax.random.normal(k2, (2, 4, 6, 8, 16), dtype=jnp.float32)
    check(x2, (2, -3, 1), "unaligned-H / segmented path")

    # 3) W*C not a multiple of 128: lane-segmented + row-segmented path.
    x3 = jax.random.normal(k3, (2, 3, 8, 5, 16), dtype=jnp.float32)
    check(x3, (1, 2, -2), "narrow-lane / segmented path")

    # 4) Zero D shift: fused B*D leading-axis blocking path.
    x4 = jax.random.normal(k4, (2, 4, 8, 8, 16), dtype=jnp.float32)
    check(x4, (0, 3, 2), "fused B*D path")

    # 5) All-zero displacement: early-return shortcut.
    out5 = jax.block_until_ready(cyclic_shift_3d(x1, (0, 0, 0)))
    assert jnp.array_equal(out5, x1), "mismatch: zero-shift shortcut"

    print("KERNEL_OK")
</pallas_src>

<mosaic_0001>
module attributes {stable_mosaic.version = 11 : i64} {
  func.func @_shift_kernel(%arg0: i32, %arg1: i32, %arg2: memref<2x1x8x128xf32, #tpu.memory_space<vmem>>, %arg3: memref<2x1x8x128xf32, #tpu.memory_space<vmem>>) attributes {dimension_semantics = [#tpu.dimension_semantics<parallel>, #tpu.dimension_semantics<parallel>], iteration_bounds = array<i64: 1, 4>, scalar_prefetch = 0 : i64, scratch_operands = 0 : i64, tpu.core_type = #tpu.core_type<tc>, window_params = [{transform_indices = @transform_0, window_bounds = array<i64: 2, 1, 8, 128>}, {transform_indices = @transform_1, window_bounds = array<i64: 2, 1, 8, 128>}]} {
    %c0 = arith.constant 0 : index
    %c0_0 = arith.constant 0 : index
    %c0_1 = arith.constant 0 : index
    %c0_2 = arith.constant 0 : index
    %0 = vector.load %arg2[%c0, %c0_0, %c0_1, %c0_2] : memref<2x1x8x128xf32, #tpu.memory_space<vmem>>, vector<1x1x8x128xf32>
    %1 = vector.shape_cast %0 : vector<1x1x8x128xf32> to vector<8x128xf32>
    %c5_i32 = arith.constant 5 : i32
    %2 = tpu.dynamic_rotate %1 by %c5_i32 dim 0 : vector<8x128xf32>, i32 -> vector<8x128xf32>
    %c16_i32 = arith.constant 16 : i32
    %3 = tpu.dynamic_rotate %2 by %c16_i32 dim 1 : vector<8x128xf32>, i32 -> vector<8x128xf32>
    %c0_3 = arith.constant 0 : index
    %c0_4 = arith.constant 0 : index
    %c0_5 = arith.constant 0 : index
    %c0_6 = arith.constant 0 : index
    %4 = vector.load %arg3[%c0_3, %c0_4, %c0_5, %c0_6] : memref<2x1x8x128xf32, #tpu.memory_space<vmem>>, vector<1x1x8x128xf32>
    %5 = vector.shape_cast %4 : vector<1x1x8x128xf32> to vector<8x128xf32>
    %6 = vector.shape_cast %3 : vector<8x128xf32> to vector<1x1x8x128xf32>
    tpu.vector_store %arg3[%c0_3, %c0_4, %c0_5, %c0_6], %6 {strides = array<i32>} : memref<2x1x8x128xf32, #tpu.memory_space<vmem>>, vector<1x1x8x128xf32>,
    %c1 = arith.constant 1 : index
    %c0_7 = arith.constant 0 : index
    %c0_8 = arith.constant 0 : index
    %c0_9 = arith.constant 0 : index
    %7 = vector.load %arg2[%c1, %c0_7, %c0_8, %c0_9] : memref<2x1x8x128xf32, #tpu.memory_space<vmem>>, vector<1x1x8x128xf32>
    %8 = vector.shape_cast %7 : vector<1x1x8x128xf32> to vector<8x128xf32>
    %c5_i32_10 = arith.constant 5 : i32
    %9 = tpu.dynamic_rotate %8 by %c5_i32_10 dim 0 : vector<8x128xf32>, i32 -> vector<8x128xf32>
    %c16_i32_11 = arith.constant 16 : i32
    %10 = tpu.dynamic_rotate %9 by %c16_i32_11 dim 1 : vector<8x128xf32>, i32 -> vector<8x128xf32>
    %c1_12 = arith.constant 1 : index
    %c0_13 = arith.constant 0 : index
    %c0_14 = arith.constant 0 : index
    %c0_15 = arith.constant 0 : index
    %11 = vector.load %arg3[%c1_12, %c0_13, %c0_14, %c0_15] : memref<2x1x8x128xf32, #tpu.memory_space<vmem>>, vector<1x1x8x128xf32>
    %12 = vector.shape_cast %11 : vector<1x1x8x128xf32> to vector<8x128xf32>
    %13 = vector.shape_cast %10 : vector<8x128xf32> to vector<1x1x8x128xf32>
    tpu.vector_store %arg3[%c1_12, %c0_13, %c0_14, %c0_15], %13 {strides = array<i32>} : memref<2x1x8x128xf32, #tpu.memory_space<vmem>>, vector<1x1x8x128xf32>,
    return
  }
  func.func @transform_0(%arg0: i32, %arg1: i32) -> (i32, i32, i32, i32) {
    %c2_i32 = arith.constant 2 : i32
    %0 = arith.subi %arg1, %c2_i32 : i32
    %c4_i32 = arith.constant 4 : i32
    %1 = arith.addi %0, %c4_i32 : i32
    %c4_i32_0 = arith.constant 4 : i32
    %c0_i32 = arith.constant 0 : i32
    %2 = arith.cmpi eq, %c4_i32_0, %c0_i32 : i32
    %c1_i32 = arith.constant 1 : i32
    %3 = arith.select %2, %c1_i32, %c4_i32_0 : i32
    %4 = arith.remsi %1, %3 : i32
    %c0_i32_1 = arith.constant 0 : i32
    %5 = arith.cmpi ne, %4, %c0_i32_1 : i32
    %c0_i32_2 = arith.constant 0 : i32
    %6 = arith.cmpi slt, %4, %c0_i32_2 : i32
    %c0_i32_3 = arith.constant 0 : i32
    %7 = arith.cmpi slt, %3, %c0_i32_3 : i32
    %8 = arith.xori %6, %7 : i1
    %9 = arith.andi %8, %5 : i1
    %10 = arith.addi %4, %3 : i32
    %11 = arith.select %9, %10, %4 : i32
    %c0_i32_4 = arith.constant 0 : i32
    %c0_i32_5 = arith.constant 0 : i32
    %c0_i32_6 = arith.constant 0 : i32
    return %arg0, %11, %c0_i32_4, %c0_i32_5 : i32, i32, i32, i32
  }
  func.func @transform_1(%arg0: i32, %arg1: i32) -> (i32, i32, i32, i32) {
    %c0_i32 = arith.constant 0 : i32
    %c0_i32_0 = arith.constant 0 : i32
    %c0_i32_1 = arith.constant 0 : i32
    return %arg0, %arg1, %c0_i32, %c0_i32_0 : i32, i32, i32, i32
  }
}

</mosaic_0001>

<llo_original>
// kernel: tpu_custom_call.1
$region0: #{tpu_custom_call.1}
  #allocation0 [shape = 'u32[]', space=smem, size = 0x4, offset = 0x4, fixed_abs, tag = 'smem constant byte address 0x4 - core index']
  #allocation1 [shape = 'u32[144,128]{1,0:T(1,128)}', space=vmem, size = 0x12000, scoped, tag = 'internal scratch']
  %s0 = inlined_call_operand.hbm [shape: f32[2,4,8,128], index: 0, kind: input, shape index: {}]
  %s1 = inlined_call_operand.hbm [shape: f32[2,4,8,128], index: 1, kind: output, shape index: {}]
  %s2 = sld [smem:[#allocation0]]
  $region41: #{tpu_custom_call.1} parent=0
    _
  %s4 = ssub.s32 1, %s2
  %s5 = scalar_select 0, %s4, %s2
  $region1: #{tpu_custom_call.1} parent=0
    #allocation2 [shape = 'u8[16384]{0}', space=vmem, size = 0x4000, scoped, tag = 'input window, operand 0']
    #allocation3 [shape = 's32[2]{0}', space=sflag, size = 0x8, scoped, tag = 'scoped memory for tpu_custom_call.1']
    #allocation4 [shape = 's32[2]{0}', space=sflag, size = 0x8, scoped, tag = 'scoped memory for tpu_custom_call.1']
    #allocation5 [shape = 'u8[16384]{0}', space=vmem, size = 0x4000, scoped, tag = 'output window, operand 0']
    %6 = vsyncpa [#allocation3], 0
    %s7 = scalar_lea.sflag [#allocation3], 1
    %8 = vsyncpa %s7, 0
    %9 = vsyncpa [#allocation4], 0
    %s10 = scalar_lea.sflag [#allocation4], 1
    %11 = vsyncpa %s10, 0
    loop: start=0, step=1, limit=6
    $region2: #{tpu_custom_call.1} parent=1 // loop_pre_header
      _
    $region3: #{tpu_custom_call.1} parent=1 // loop_header
      %s13 = sphi 0, %s17
      %p14 = scmp.ge.s32.totalorder %s13, 6
      %s20 = sphi 0, %s32
      %s21 = sphi 0, %s28
      %s22 = sphi 0, %s20
      %s23 = sphi 0, %s21
      %s24 = sphi 0, %s22
      %s25 = sphi 0, %s23
      %s63 = sphi 0, %s65
      %s66 = sphi 0, %s63
      %s67 = sphi 0, %s66
      %s83 = sphi 0, %s67
      %s91 = sphi 0, %s93
      %s94 = sphi 0, %s91
      %s95 = sphi 0, %s94
      %s111 = sphi 0, %s95
    $region4: #{tpu_custom_call.1} parent=1 // loop_header_branch
      %16 = sbr.rel (%p14) target = $region8
    $region5: #{tpu_custom_call.1} parent=1 // loop_body
      %s18 = ssub.s32 %s13, 1
      %s19 = ssub.s32 %s13, 2
      %s26 = sadd.s32 1, %s21
      %p27 = scmp.ge.s32.totalorder %s26, 4
      %s28 = scalar_select %p27, 0, %s26
      %s29 = sadd.s32 1, %s20
      %s30 = scalar_select %p27, %s29, %s20
      %p31 = scmp.ge.s32.totalorder %s30, 1
      %s32 = scalar_select %p31, 0, %s30
      %s33 = sadd.s32 %s21, 2
      %p34 = scmp.lt.s32.totalorder %s33, 0
      %s35 = ssub.s32 0, %s33
      %s36 = scalar_select %p34, %s35, %s33
      %s37 = sand.u32 %s36, 3
      %s38 = ssub.s32 0, %s37
      %s39 = scalar_select %p34, %s38, %s37
      %p40 = scmp.ne.s32.totalorder %s39, 0
      %p41 = scmp.lt.s32.totalorder %s39, 0
      %p42 = pnand %p41, %p40
      %p43 = pneg %p42
      %s44 = sadd.s32 %s39, 4
      %s45 = scalar_select %p43, %s44, %s39
      %s46 = sadd.s32 %s28, 2
      %p47 = scmp.lt.s32.totalorder %s46, 0
      %s48 = ssub.s32 0, %s46
      %s49 = scalar_select %p47, %s48, %s46
      %s50 = sand.u32 %s49, 3
      %s51 = ssub.s32 0, %s50
      %s52 = scalar_select %p47, %s51, %s50
      %p53 = scmp.ne.s32.totalorder %s52, 0
      %p54 = scmp.lt.s32.totalorder %s52, 0
      %p55 = pnand %p54, %p53
      %p56 = pneg %p55
      %s57 = sadd.s32 %s52, 4
      %s58 = scalar_select %p56, %s57, %s52
      %s59 = ssub.s32 %s20, %s32
      %s60 = ssub.s32 %s45, %s58
      %s61 = sor.u32 %s59, %s60
      %p62 = scmp.eq.s32.totalorder %s61, 0
      %s64 = sadd.s32 %s63, 1
      %s65 = scalar_select %p62, %s63, %s64
      %p68 = pneg %p62
      %p69 = scmp.eq.s32.totalorder %s13, 3
      %p70 = por %p68, %p69
      %p71 = scmp.ne.s32.totalorder %s63, %s66
      %p72 = scmp.eq.s32.totalorder %s13, 0
      %p73 = por %p71, %p72
      %p74 = scmp.ne.s32.totalorder %s63, %s66
      %p75 = scmp.eq.s32.totalorder %s18, 3
      %p76 = por %p74, %p75
      %p77 = scmp.ne.s32.totalorder %s66, %s67
      %p78 = scmp.eq.s32.totalorder %s18, 0
      %p79 = por %p77, %p78
      %p80 = scmp.ne.s32.totalorder %s66, %s67
      %p81 = scmp.eq.s32.totalorder %s19, 3
      %p82 = por %p80, %p81
      %p84 = scmp.ne.s32.totalorder %s67, %s83
      %p85 = scmp.eq.s32.totalorder %s19, 0
      %p86 = por %p84, %p85
      %s87 = ssub.s32 %s20, %s32
      %s88 = ssub.s32 %s21, %s28
      %s89 = sor.u32 %s87, %s88
      %p90 = scmp.eq.s32.totalorder %s89, 0
      %s92 = sadd.s32 %s91, 1
      %s93 = scalar_select %p90, %s91, %s92
      %p96 = pneg %p90
      %p97 = scmp.eq.s32.totalorder %s13, 3
      %p98 = por %p96, %p97
      %p99 = scmp.ne.s32.totalorder %s91, %s94
      %p100 = scmp.eq.s32.totalorder %s13, 0
      %p101 = por %p99, %p100
      %p102 = scmp.ne.s32.totalorder %s91, %s94
      %p103 = scmp.eq.s32.totalorder %s18, 3
      %p104 = por %p102, %p103
      %p105 = scmp.ne.s32.totalorder %s94, %s95
      %p106 = scmp.eq.s32.totalorder %s18, 0
      %p107 = por %p105, %p106
      %p108 = scmp.ne.s32.totalorder %s94, %s95
      %p109 = scmp.eq.s32.totalorder %s19, 3
      %p110 = por %p108, %p109
      %p112 = scmp.ne.s32.totalorder %s95, %s111
      %p113 = scmp.eq.s32.totalorder %s19, 0
      %p114 = por %p112, %p113
      %p115 = scmp.le.s32.totalorder 1, %s13
      %p116 = scmp.lt.s32.totalorder %s13, 5
      %p117 = pnand %p115, %p116
      %p118 = pneg %p117
      // Predicated region
      $region9: #{tpu_custom_call.1} parent=5 // pred_check
        _
      $region10: #{tpu_custom_call.1} parent=5 // pred_check_branch
        %120 = sbr.rel (%p117) target = $region12
      $region11: #{tpu_custom_call.1} parent=5 // pred_region
        %s121 = ssub.s32 %s13, 1
      $region12: #{tpu_custom_call.1} parent=5 // pred_fallthru
        _
      %p122 = scmp.lt.s32.totalorder %s13, 4
      // Predicated region
      $region13: #{tpu_custom_call.1} parent=5 // pred_check
        %p123 = pneg %p122
      $region14: #{tpu_custom_call.1} parent=5 // pred_check_branch
        %125 = sbr.rel (%p123) target = $region16
      $region15: #{tpu_custom_call.1} parent=5 // pred_region
        // Predicated region
        $region17: #{tpu_custom_call.1} parent=15 // pred_check
          %p126 = pneg %p73
        $region18: #{tpu_custom_call.1} parent=15 // pred_check_branch
          %128 = sbr.rel (%p126) target = $region20
        $region19: #{tpu_custom_call.1} parent=15 // pred_region
          %s129 = sand.u32 %s63, 1
          %s130 = scalar_lea.sflag [#allocation3], %s129
          %s131 = sand.u32 %s63, 1
          %s132 = smul.addr %s131, 16
          %s133 = scalar_lea.vmem [#allocation2], %s132
          %s134 = sadd.s32 %s21, 2
          %p135 = scmp.lt.s32.totalorder %s134, 0
          %s136 = ssub.s32 0, %s134
          %s137 = scalar_select %p135, %s136, %s134
          %s138 = sand.u32 %s137, 3
          %s139 = ssub.s32 0, %s138
          %s140 = scalar_select %p135, %s139, %s138
          %p141 = scmp.ne.s32.totalorder %s140, 0
          %p142 = scmp.lt.s32.totalorder %s140, 0
          %p143 = pnand %p142, %p141
          %p144 = pneg %p143
          %s145 = sadd.s32 %s140, 4
          %s146 = scalar_select %p144, %s145, %s140
          %s147 = smul.u32 2, %s20
          %s149 = ssub.s32 256, 256
          %150 = vsyncadd %s130, %s149
          %s151 = smul.addr %s147, 4
          %s152 = sadd.s32 %s146, %s151
          %s153 = smul.addr %s152, 128
          %s154 = scalar_lea.hbm %s0, %s153
          %s155 = sshll.u32 %s133, 4
          %s156 = int_to_ptr.vmem [resolvable:$true] %s155
          %161 = dma.hbm_to_vmem [thread:$0]  %s154, 256, %s156, %s130, 512, 128, 8
        $region20: #{tpu_custom_call.1} parent=15 // pred_fallthru
          _
      $region16: #{tpu_custom_call.1} parent=5 // pred_fallthru
        _
      %p162 = scmp.le.s32.totalorder 1, %s13
      %p163 = scmp.lt.s32.totalorder %s13, 5
      %p164 = pnand %p162, %p163
      %p165 = pneg %p164
      // Predicated region
      $region21: #{tpu_custom_call.1} parent=5 // pred_check
        _
      $region22: #{tpu_custom_call.1} parent=5 // pred_check_branch
        %167 = sbr.rel (%p164) target = $region24
      $region23: #{tpu_custom_call.1} parent=5 // pred_region
        %s168 = ssub.s32 %s13, 1
        %s169 = sand.u32 %s66, 1
        %s170 = scalar_lea.sflag [#allocation3], %s169
        %s171 = sand.u32 %s66, 1
        %s172 = smul.addr %s171, 16
        %s173 = scalar_lea.vmem [#allocation2], %s172
        // Predicated region
        $region25: #{tpu_custom_call.1} parent=23 // pred_check
          %p174 = pneg %p79
        $region26: #{tpu_custom_call.1} parent=23 // pred_check_branch
          %176 = sbr.rel (%p174) target = $region28
        $region27: #{tpu_custom_call.1} parent=23 // pred_region
          %177 = dma.done %s170, 256
        $region28: #{tpu_custom_call.1} parent=23 // pred_fallthru
          _
        %s178 = sand.u32 %s66, 1
        %s179 = scalar_lea.sflag [#allocation3], %s178
        %s180 = sand.u32 %s66, 1
        %s181 = smul.addr %s180, 16
        %s182 = scalar_lea.vmem [#allocation2], %s181
        %p183 = pneg %p79
        %p184 = pneg %p76
        %p185 = pneg %p107
        %p186 = pneg %p104
        %s187 = sand.u32 %s94, 1
        %s188 = scalar_lea.sflag [#allocation4], %s187
        %s189 = sand.u32 %s94, 1
        %s190 = smul.addr %s189, 16
        %s191 = scalar_lea.vmem [#allocation5], %s190
        %s192 = sadd.s32 %s23, 2
        %p193 = scmp.lt.s32.totalorder %s192, 0
        %s194 = ssub.s32 0, %s192
        %s195 = scalar_select %p193, %s194, %s192
        %s196 = sand.u32 %s195, 3
        %s197 = ssub.s32 0, %s196
        %s198 = scalar_select %p193, %s197, %s196
        %p199 = scmp.ne.s32.totalorder %s198, 0
        %p200 = scmp.lt.s32.totalorder %s198, 0
        %p201 = pnand %p200, %p199
        %p202 = pneg %p201
        %s203 = sadd.s32 %s198, 4
        %s204 = scalar_select %p202, %s203, %s198
        %s205 = smul.u32 2, %s22
        %s206 = smul.u32 2, %s22
        %v207 = vld [vmem:[%s173] sm:$0xff]
        %v208 = vrot.slane %v207, 3
        %209 = vrot.lane.b32.xlu0 %v208, 16
        %v210 = vpop.permute.xlu0 %209
        %211 = vst [vmem:[%s191] sm:$0xff] %v210
        %s212 = scalar_lea.vmem %s173, 8 [#allocation2]
        %v213 = vld [vmem:[%s212] sm:$0xff]
        %v214 = vrot.slane %v213, 3
        %215 = vrot.lane.b32.xlu0 %v214, 16
        %v216 = vpop.permute.xlu0 %215
        %s217 = scalar_lea.vmem %s191, 8 [#allocation5]
        %218 = vst [vmem:[%s217] sm:$0xff] %v216
        %s219 = sand.u32 %s94, 1
        %s220 = scalar_lea.sflag [#allocation4], %s219
        %s221 = sand.u32 %s94, 1
        %s222 = smul.addr %s221, 16
        %s223 = scalar_lea.vmem [#allocation5], %s222
        // Predicated region
        $region29: #{tpu_custom_call.1} parent=23 // pred_check
          %p224 = pneg %p104
        $region30: #{tpu_custom_call.1} parent=23 // pred_check_branch
          %226 = sbr.rel (%p224) target = $region32
        $region31: #{tpu_custom_call.1} parent=23 // pred_region
          %s227 = smul.u32 2, %s22
          %s229 = ssub.s32 256, 256
          %230 = vsyncadd %s220, %s229
          %s231 = smul.addr %s227, 4
          %s232 = sadd.s32 %s23, %s231
          %s233 = smul.addr %s232, 128
          %s234 = scalar_lea.hbm %s1, %s233
          %s235 = sshll.u32 %s223, 4
          %s236 = int_to_ptr.vmem [resolvable:$true] %s235
          %241 = dma.vmem_to_hbm [thread:$0]  %s236, 256, %s234, %s220, 128, 512, 8
        $region32: #{tpu_custom_call.1} parent=23 // pred_fallthru
          _
      $region24: #{tpu_custom_call.1} parent=5 // pred_fallthru
        _
      %p242 = scmp.le.s32.totalorder 2, %s13
      // Predicated region
      $region33: #{tpu_custom_call.1} parent=5 // pred_check
        %p243 = pneg %p242
      $region34: #{tpu_custom_call.1} parent=5 // pred_check_branch
        %245 = sbr.rel (%p243) target = $region36
      $region35: #{tpu_custom_call.1} parent=5 // pred_region
        %s246 = ssub.s32 %s13, 2
        // Predicated region
        $region37: #{tpu_custom_call.1} parent=35 // pred_check
          %p247 = pneg %p110
        $region38: #{tpu_custom_call.1} parent=35 // pred_check_branch
          %249 = sbr.rel (%p247) target = $region40
        $region39: #{tpu_custom_call.1} parent=35 // pred_region
          %s250 = sand.u32 %s95, 1
          %s251 = scalar_lea.sflag [#allocation4], %s250
          %s252 = sand.u32 %s95, 1
          %s253 = smul.addr %s252, 16
          %s254 = scalar_lea.vmem [#allocation5], %s253
          %255 = dma.done %s251, 256
        $region40: #{tpu_custom_call.1} parent=35 // pred_fallthru
          _
      $region36: #{tpu_custom_call.1} parent=5 // pred_fallthru
        _
    $region6: #{tpu_custom_call.1} parent=1 // loop_footer
      %s17 = sadd.s32 1, %s13
    $region7: #{tpu_custom_call.1} parent=1 // loop_footer_branch
      %12 = sbr.rel target = $region3
    $region8: #{tpu_custom_call.1} parent=1 // loop_exit
      _
    %256 = vsyncpa [#allocation3], 1
    %s257 = scalar_lea.sflag [#allocation3], 1
    %258 = vsyncpa %s257, 1
    %259 = vsyncpa [#allocation4], 1
    %s260 = scalar_lea.sflag [#allocation4], 1
    %261 = vsyncpa %s260, 1

</llo_original>
